<compile_context>
chip_gen: v6e
topology: v6e:2x2x1
jax: 0.10.0
libtpu: 0.0.40
codegen_flags: <defaults>
</compile_context>

<pallas_src>
import math
import functools

import jax
import jax.numpy as jnp
from jax.experimental import pallas as pl
from jax.experimental.pallas import tpu as pltpu


# ---------------------------------------------------------------------------
# Kernel
# ---------------------------------------------------------------------------
def _flash_attention_kernel(q_ref, k_ref, v_ref, o_ref,
                            qs_ref, m_ref, l_ref, acc_ref, *, scale):
    """One (q-tile, kv-tile) flash-attention step for a block of Hb heads.

    q_ref:   (Hb, tq, D)    query tile (input dtype), resident across KV axis
    k_ref:   (Hb, D, tkv)   key tile, already (contraction, lanes)
    v_ref:   (Hb, tkv, Dv)  value tile
    o_ref:   (Hb, tq, Dv)   output tile (written on the last KV step only)
    qs_ref:  (Hb, tq, D)    scaled-q scratch (hoisted 1/sqrt(d) multiply)
    m_ref:   (Hb, tq, 1)    f32 running max
    l_ref:   (Hb, tq, 1)    f32 running softmax denominator
    acc_ref: (Hb, tq, Dv)   f32 running un-normalized output
    """
    kv_idx = pl.program_id(3)

    @pl.when(kv_idx == 0)
    def _init():
        # q is resident across the whole KV loop -> scale it exactly once.
        qs_ref[...] = (q_ref[...] * scale).astype(qs_ref.dtype)
        m_ref[...] = jnp.full_like(m_ref, -jnp.inf)
        l_ref[...] = jnp.zeros_like(l_ref)
        acc_ref[...] = jnp.zeros_like(acc_ref)

    # Batched-over-heads MXU matmul in the input dtype, f32 accumulation.
    s = jnp.einsum("hqd,hdk->hqk", qs_ref[...], k_ref[...],
                   preferred_element_type=jnp.float32)   # (Hb, tq, tkv) f32

    m_prev = m_ref[...]
    m_new = jnp.maximum(m_prev, jnp.max(s, axis=-1, keepdims=True))
    alpha = jnp.exp(m_prev - m_new)          # rescale factor for old partials
    p = jnp.exp(s - m_new)                   # (Hb, tq, tkv) f32

    l_ref[...] = alpha * l_ref[...] + jnp.sum(p, axis=-1, keepdims=True)
    acc_ref[...] = alpha * acc_ref[...] + jnp.einsum(
        "hqk,hkd->hqd", p.astype(v_ref.dtype), v_ref[...],
        preferred_element_type=jnp.float32)
    m_ref[...] = m_new

    @pl.when(kv_idx == pl.num_programs(3) - 1)
    def _finalize():
        # Normalize once per output element; reciprocal goes to the EUP slot.
        inv_l = pl.reciprocal(l_ref[...], approx=True)
        o_ref[...] = (acc_ref[...] * inv_l).astype(o_ref.dtype)
    # TODO(synk): dropout with p>0 not implemented (module default p=0 -> identity).


# ---------------------------------------------------------------------------
# Tile selection (VMEM-budget aware, generation-safe)
# ---------------------------------------------------------------------------
_VMEM_TILE_BUDGET = 20 * 1024 * 1024   # stays well under v7x's 64 MiB physical


def _pad_tile_bytes(rows, cols, itemsize):
    """Crude VMEM footprint of a 2-D tile (lane dim -> 128, sublane -> 8)."""
    return (((rows + 7) // 8) * 8) * (((cols + 127) // 128) * 128) * itemsize


def _vmem_estimate(hb, bq, bkv, d, dv, in_itemsize, out_itemsize):
    est = 0
    est += 2 * hb * _pad_tile_bytes(bq, d, in_itemsize)       # q (double buf)
    est += 2 * hb * _pad_tile_bytes(d, bkv, in_itemsize)      # k (double buf)
    est += 2 * hb * _pad_tile_bytes(bkv, dv, in_itemsize)     # v (double buf)
    est += 2 * hb * _pad_tile_bytes(bq, dv, out_itemsize)     # out (double buf)
    est += hb * _pad_tile_bytes(bq, d, in_itemsize)           # scaled-q scratch
    est += hb * _pad_tile_bytes(bq, dv, 4)                    # f32 acc
    est += 2 * hb * _pad_tile_bytes(bq, 1, 4)                 # m, l
    est += 3 * hb * _pad_tile_bytes(bq, bkv, 4)               # s / p temporaries
    return est


def _divisor_candidates(size, candidates):
    out = {c for c in candidates if size % c == 0}
    out.add(size)   # full dim is always legal
    return sorted(out, reverse=True)


def _select_blocks(B, H, S, D, Dv, in_itemsize, out_itemsize,
                   block_q, block_kv, block_h):
    # Head packing: batch heads per step, aiming for ~128 output lanes.
    if block_h is None:
        if Dv >= 128:
            block_h = 1
        else:
            want = min(H, -(-128 // Dv))
            block_h = 1
            for hb in range(want, 0, -1):
                if H % hb == 0:
                    block_h = hb
                    break
    assert H % block_h == 0

    bq_cands = _divisor_candidates(S, (1024, 512, 256, 128, 64, 32, 16, 8))
    bkv_cands = _divisor_candidates(S, (2048, 1024, 512, 256, 128))

    # Keep >= 2 parallel grid steps so both v7x TensorCores get work.
    if B * (H // block_h) < 2:
        halved = [c for c in bq_cands if c <= S // 2]
        if halved:
            bq_cands = halved

    if block_q is not None:
        bq_cands = [block_q]
    if block_kv is not None:
        bkv_cands = [block_kv]

    # Prefer the largest block_q (each q-tile re-streams full K/V from HBM),
    # then the largest block_kv that still fits the VMEM budget.
    for bq in bq_cands:
        for bkv in bkv_cands:
            if _vmem_estimate(block_h, bq, bkv, D, Dv,
                              in_itemsize, out_itemsize) <= _VMEM_TILE_BUDGET:
                return block_h, bq, bkv
    return block_h, bq_cands[-1], bkv_cands[-1]


# ---------------------------------------------------------------------------
# Wrapper
# ---------------------------------------------------------------------------
def attention(q, k, v, emb_dim, head, *,
              block_q=None, block_kv=None, block_h=None,
              compute_dtype=jnp.bfloat16):
    """Pallas flash-attention equivalent of Attention(emb_dim, head).forward.

    q: [B, H, S, D], k: [B, H, D, S] (pre-transposed), v: [B, H, S, Dv].
    """
    B, H, S, D = q.shape
    Dv = v.shape[-1]
    assert k.shape == (B, H, D, S) and v.shape == (B, H, S, Dv)

    out_dtype = q.dtype
    # MXU fast path: bf16 inputs with f32 accumulation (f32 matmuls run at a
    # small fraction of bf16 rate on all TPU generations).
    if compute_dtype is not None and q.dtype == jnp.float32:
        q = q.astype(compute_dtype)
        k = k.astype(compute_dtype)
        v = v.astype(compute_dtype)

    in_itemsize = jnp.dtype(q.dtype).itemsize
    out_itemsize = jnp.dtype(out_dtype).itemsize

    block_h, block_q, block_kv = _select_blocks(
        B, H, S, D, Dv, in_itemsize, out_itemsize, block_q, block_kv, block_h)
    assert S % block_q == 0 and S % block_kv == 0 and H % block_h == 0

    scale = 1.0 / math.sqrt(emb_dim // head)
    kernel = functools.partial(_flash_attention_kernel, scale=scale)

    grid = (B, H // block_h, S // block_q, S // block_kv)

    # TODO(synk): when block_h * Dv < 128 the output stores are still not
    # lane-dense; a full layout change (heads riding the lane axis) would fix it.
    return pl.pallas_call(
        kernel,
        out_shape=jax.ShapeDtypeStruct((B, H, S, Dv), out_dtype),
        grid_spec=pltpu.PrefetchScalarGridSpec(
            num_scalar_prefetch=0,
            grid=grid,
            in_specs=[
                pl.BlockSpec((None, block_h, block_q, D),
                             lambda b, h, i, j: (b, h, i, 0)),
                pl.BlockSpec((None, block_h, D, block_kv),
                             lambda b, h, i, j: (b, h, 0, j)),
                pl.BlockSpec((None, block_h, block_kv, Dv),
                             lambda b, h, i, j: (b, h, j, 0)),
            ],
            out_specs=pl.BlockSpec((None, block_h, block_q, Dv),
                                   lambda b, h, i, j: (b, h, i, 0)),
            scratch_shapes=[
                pltpu.VMEM((block_h, block_q, D), q.dtype),      # scaled q
                pltpu.VMEM((block_h, block_q, 1), jnp.float32),  # running max
                pltpu.VMEM((block_h, block_q, 1), jnp.float32),  # running denom
                pltpu.VMEM((block_h, block_q, Dv), jnp.float32), # running acc
            ],
        ),
        compiler_params=pltpu.CompilerParams(
            dimension_semantics=("parallel", "parallel", "parallel",
                                 "arbitrary"),
            # v5e/v6e: 128 MiB physical VMEM; v7x: 64 MiB. Tile selection
            # budgets ~20 MiB, so 48 MiB is safe headroom on all generations.
            vmem_limit_bytes=48 * 1024 * 1024,
        ),
    )(q, k, v)


def attention_ref(q, k, v, emb_dim, head):
    """Pure-JAX reference mirroring the PyTorch forward (f32 math)."""
    scale = 1.0 / math.sqrt(emb_dim // head)
    qk = jnp.einsum("bhsd,bhdt->bhst", q.astype(jnp.float32),
                    k.astype(jnp.float32)) * scale
    att = jax.nn.softmax(qk, axis=-1)
    return jnp.einsum("bhst,bhtd->bhsd", att, v.astype(jnp.float32))


if __name__ == "__main__":
    # Test 1: the module's tiny config (emb_dim=32, head=4 -> head_dim = 8),
    # exercising the head-packing path (4 heads per step) and auto tiles.
    B, H, S = 2, 4, 8
    emb_dim, head = 32, 4
    D = emb_dim // head

    key = jax.random.PRNGKey(0)
    kq, kk, kv_ = jax.random.split(key, 3)
    q = jax.random.normal(kq, (B, H, S, D), dtype=jnp.float32)
    k = jax.random.normal(kk, (B, H, D, S), dtype=jnp.float32)  # pre-transposed
    v = jax.random.normal(kv_, (B, H, S, D), dtype=jnp.float32)

    out = jax.block_until_ready(attention(q, k, v, emb_dim, head))
    ref = attention_ref(q, k, v, emb_dim, head)
    assert out.shape == (B, H, S, D)
    assert jnp.allclose(out, ref.astype(out.dtype), atol=2e-2, rtol=2e-2)

    # Test 2: multi-tile case with explicit blocks exercising the online
    # softmax across several KV tiles, several q tiles and packed heads.
    B2, H2, S2 = 1, 2, 256
    emb_dim2, head2 = 128, 2
    D2 = emb_dim2 // head2
    kq2, kk2, kv2 = jax.random.split(jax.random.PRNGKey(1), 3)
    q2 = jax.random.normal(kq2, (B2, H2, S2, D2), dtype=jnp.float32)
    k2 = jax.random.normal(kk2, (B2, H2, D2, S2), dtype=jnp.float32)
    v2 = jax.random.normal(kv2, (B2, H2, S2, D2), dtype=jnp.float32)

    out2 = jax.block_until_ready(
        attention(q2, k2, v2, emb_dim2, head2, block_q=64, block_kv=128))
    ref2 = attention_ref(q2, k2, v2, emb_dim2, head2)
    assert out2.shape == (B2, H2, S2, D2)
    assert jnp.allclose(out2, ref2.astype(out2.dtype), atol=2e-2, rtol=2e-2)

    # Test 3: same data, fully automatic tile/head-block selection
    # (also exercises the >=2 parallel-steps adjustment for v7x).
    out3 = jax.block_until_ready(attention(q2, k2, v2, emb_dim2, head2))
    assert out3.shape == (B2, H2, S2, D2)
    assert jnp.allclose(out3, ref2.astype(out3.dtype), atol=2e-2, rtol=2e-2)

    print("KERNEL_OK")
</pallas_src>

<mosaic_0001>
module attributes {stable_mosaic.version = 11 : i64} {
  func.func @_flash_attention_kernel(%arg0: i32, %arg1: i32, %arg2: i32, %arg3: i32, %arg4: memref<1x4x8x8xbf16, #tpu.memory_space<vmem>>, %arg5: memref<1x4x8x8xbf16, #tpu.memory_space<vmem>>, %arg6: memref<1x4x8x8xbf16, #tpu.memory_space<vmem>>, %arg7: memref<1x4x8x8xf32, #tpu.memory_space<vmem>>, %arg8: memref<4x8x8xbf16, #tpu.memory_space<vmem>>, %arg9: memref<4x8x1xf32, #tpu.memory_space<vmem>>, %arg10: memref<4x8x1xf32, #tpu.memory_space<vmem>>, %arg11: memref<4x8x8xf32, #tpu.memory_space<vmem>>) attributes {dimension_semantics = [#tpu.dimension_semantics<parallel>, #tpu.dimension_semantics<parallel>, #tpu.dimension_semantics<parallel>, #tpu.dimension_semantics<arbitrary>], iteration_bounds = array<i64: 2, 1, 1, 1>, scalar_prefetch = 0 : i64, scratch_operands = 4 : i64, tpu.core_type = #tpu.core_type<tc>, window_params = [{transform_indices = @transform_0, window_bounds = array<i64: 1, 4, 8, 8>}, {transform_indices = @transform_1, window_bounds = array<i64: 1, 4, 8, 8>}, {transform_indices = @transform_2, window_bounds = array<i64: 1, 4, 8, 8>}, {transform_indices = @transform_3, window_bounds = array<i64: 1, 4, 8, 8>}]} {
    %c0_i32 = arith.constant 0 : i32
    %0 = arith.cmpi eq, %arg3, %c0_i32 : i32
    %1 = arith.extui %0 : i1 to i32
    %c0_i32_0 = arith.constant 0 : i32
    %2 = arith.cmpi ne, %1, %c0_i32_0 : i32
    scf.if %2 {
      %c0_34 = arith.constant 0 : index
      %c0_35 = arith.constant 0 : index
      %c0_36 = arith.constant 0 : index
      %c0_37 = arith.constant 0 : index
      %35 = vector.load %arg4[%c0_34, %c0_35, %c0_36, %c0_37] : memref<1x4x8x8xbf16, #tpu.memory_space<vmem>>, vector<1x4x8x8xbf16>
      %36 = vector.shape_cast %35 : vector<1x4x8x8xbf16> to vector<4x8x8xbf16>
      %cst_38 = arith.constant 3.535160e-01 : bf16
      %37 = vector.broadcast %cst_38 : bf16 to vector<4x8x8xbf16>
      %38 = arith.mulf %36, %37 : vector<4x8x8xbf16>
      %c0_39 = arith.constant 0 : index
      %c0_40 = arith.constant 0 : index
      %c0_41 = arith.constant 0 : index
      %39 = vector.load %arg8[%c0_39, %c0_40, %c0_41] : memref<4x8x8xbf16, #tpu.memory_space<vmem>>, vector<4x8x8xbf16>
      tpu.vector_store %arg8[%c0_39, %c0_40, %c0_41], %38 {strides = array<i32>} : memref<4x8x8xbf16, #tpu.memory_space<vmem>>, vector<4x8x8xbf16>,
      %cst_42 = arith.constant 0xFF800000 : f32
      %40 = vector.broadcast %cst_42 : f32 to vector<4x8x1xf32>
      %c0_43 = arith.constant 0 : index
      %c0_44 = arith.constant 0 : index
      %c0_45 = arith.constant 0 : index
      %41 = vector.load %arg9[%c0_43, %c0_44, %c0_45] : memref<4x8x1xf32, #tpu.memory_space<vmem>>, vector<4x8x1xf32>
      tpu.vector_store %arg9[%c0_43, %c0_44, %c0_45], %40 {strides = array<i32>} : memref<4x8x1xf32, #tpu.memory_space<vmem>>, vector<4x8x1xf32>,
      %cst_46 = arith.constant 0.000000e+00 : f32
      %42 = vector.broadcast %cst_46 : f32 to vector<4x8x1xf32>
      %c0_47 = arith.constant 0 : index
      %c0_48 = arith.constant 0 : index
      %c0_49 = arith.constant 0 : index
      %43 = vector.load %arg10[%c0_47, %c0_48, %c0_49] : memref<4x8x1xf32, #tpu.memory_space<vmem>>, vector<4x8x1xf32>
      tpu.vector_store %arg10[%c0_47, %c0_48, %c0_49], %42 {strides = array<i32>} : memref<4x8x1xf32, #tpu.memory_space<vmem>>, vector<4x8x1xf32>,
      %cst_50 = arith.constant 0.000000e+00 : f32
      %44 = vector.broadcast %cst_50 : f32 to vector<4x8x8xf32>
      %c0_51 = arith.constant 0 : index
      %c0_52 = arith.constant 0 : index
      %c0_53 = arith.constant 0 : index
      %45 = vector.load %arg11[%c0_51, %c0_52, %c0_53] : memref<4x8x8xf32, #tpu.memory_space<vmem>>, vector<4x8x8xf32>
      tpu.vector_store %arg11[%c0_51, %c0_52, %c0_53], %44 {strides = array<i32>} : memref<4x8x8xf32, #tpu.memory_space<vmem>>, vector<4x8x8xf32>,
    } else {
    }
    %c0 = arith.constant 0 : index
    %c0_1 = arith.constant 0 : index
    %c0_2 = arith.constant 0 : index
    %3 = vector.load %arg8[%c0, %c0_1, %c0_2] : memref<4x8x8xbf16, #tpu.memory_space<vmem>>, vector<4x8x8xbf16>
    %c0_3 = arith.constant 0 : index
    %c0_4 = arith.constant 0 : index
    %c0_5 = arith.constant 0 : index
    %c0_6 = arith.constant 0 : index
    %4 = vector.load %arg5[%c0_3, %c0_4, %c0_5, %c0_6] : memref<1x4x8x8xbf16, #tpu.memory_space<vmem>>, vector<1x4x8x8xbf16>
    %5 = vector.shape_cast %4 : vector<1x4x8x8xbf16> to vector<4x8x8xbf16>
    "tpu.trace_start"() <{level = 10 : i32, message = "hqd,hdk->hqk"}> : () -> ()
    %cst = arith.constant dense<0.000000e+00> : vector<4x8x8xf32>
    %6 = tpu.matmul %3, %5, %cst {dimension_numbers = #tpu.dot_dimension_numbers<[2], [1], [1], [2], [0, 0, 0, 1, 1, 2], [0], [0]>} : vector<4x8x8xbf16>, vector<4x8x8xbf16>, vector<4x8x8xf32> -> vector<4x8x8xf32>
    "tpu.trace_stop"() : () -> ()
    %c0_7 = arith.constant 0 : index
    %c0_8 = arith.constant 0 : index
    %c0_9 = arith.constant 0 : index
    %7 = vector.load %arg9[%c0_7, %c0_8, %c0_9] : memref<4x8x1xf32, #tpu.memory_space<vmem>>, vector<4x8x1xf32>
    %cst_10 = arith.constant dense<0xFF800000> : vector<4x8xf32>
    %8 = vector.multi_reduction <maximumf>, %6, %cst_10 [2] : vector<4x8x8xf32> to vector<4x8xf32>
    %9 = vector.shape_cast %8 : vector<4x8xf32> to vector<4x8x1xf32>
    %10 = arith.maximumf %7, %9 : vector<4x8x1xf32>
    %11 = arith.subf %7, %10 : vector<4x8x1xf32>
    %12 = math.exp %11 : vector<4x8x1xf32>
    %13 = vector.broadcast %10 : vector<4x8x1xf32> to vector<4x8x8xf32>
    %14 = arith.subf %6, %13 : vector<4x8x8xf32>
    %15 = math.exp %14 : vector<4x8x8xf32>
    %c0_11 = arith.constant 0 : index
    %c0_12 = arith.constant 0 : index
    %c0_13 = arith.constant 0 : index
    %16 = vector.load %arg10[%c0_11, %c0_12, %c0_13] : memref<4x8x1xf32, #tpu.memory_space<vmem>>, vector<4x8x1xf32>
    %17 = arith.mulf %12, %16 : vector<4x8x1xf32>
    %cst_14 = arith.constant dense<0.000000e+00> : vector<4x8xf32>
    %18 = vector.multi_reduction <add>, %15, %cst_14 [2] : vector<4x8x8xf32> to vector<4x8xf32>
    %19 = vector.shape_cast %18 : vector<4x8xf32> to vector<4x8x1xf32>
    %20 = arith.addf %17, %19 : vector<4x8x1xf32>
    %c0_15 = arith.constant 0 : index
    %c0_16 = arith.constant 0 : index
    %c0_17 = arith.constant 0 : index
    %21 = vector.load %arg10[%c0_15, %c0_16, %c0_17] : memref<4x8x1xf32, #tpu.memory_space<vmem>>, vector<4x8x1xf32>
    tpu.vector_store %arg10[%c0_15, %c0_16, %c0_17], %20 {strides = array<i32>} : memref<4x8x1xf32, #tpu.memory_space<vmem>>, vector<4x8x1xf32>,
    %c0_18 = arith.constant 0 : index
    %c0_19 = arith.constant 0 : index
    %c0_20 = arith.constant 0 : index
    %22 = vector.load %arg11[%c0_18, %c0_19, %c0_20] : memref<4x8x8xf32, #tpu.memory_space<vmem>>, vector<4x8x8xf32>
    %23 = vector.broadcast %12 : vector<4x8x1xf32> to vector<4x8x8xf32>
    %24 = arith.mulf %23, %22 : vector<4x8x8xf32>
    %25 = arith.truncf %15 : vector<4x8x8xf32> to vector<4x8x8xbf16>
    %c0_21 = arith.constant 0 : index
    %c0_22 = arith.constant 0 : index
    %c0_23 = arith.constant 0 : index
    %c0_24 = arith.constant 0 : index
    %26 = vector.load %arg6[%c0_21, %c0_22, %c0_23, %c0_24] : memref<1x4x8x8xbf16, #tpu.memory_space<vmem>>, vector<1x4x8x8xbf16>
    %27 = vector.shape_cast %26 : vector<1x4x8x8xbf16> to vector<4x8x8xbf16>
    "tpu.trace_start"() <{level = 10 : i32, message = "hqk,hkd->hqd"}> : () -> ()
    %cst_25 = arith.constant dense<0.000000e+00> : vector<4x8x8xf32>
    %28 = tpu.matmul %25, %27, %cst_25 {dimension_numbers = #tpu.dot_dimension_numbers<[2], [1], [1], [2], [0, 0, 0, 1, 1, 2], [0], [0]>} : vector<4x8x8xbf16>, vector<4x8x8xbf16>, vector<4x8x8xf32> -> vector<4x8x8xf32>
    "tpu.trace_stop"() : () -> ()
    %29 = arith.addf %24, %28 : vector<4x8x8xf32>
    %c0_26 = arith.constant 0 : index
    %c0_27 = arith.constant 0 : index
    %c0_28 = arith.constant 0 : index
    %30 = vector.load %arg11[%c0_26, %c0_27, %c0_28] : memref<4x8x8xf32, #tpu.memory_space<vmem>>, vector<4x8x8xf32>
    tpu.vector_store %arg11[%c0_26, %c0_27, %c0_28], %29 {strides = array<i32>} : memref<4x8x8xf32, #tpu.memory_space<vmem>>, vector<4x8x8xf32>,
    %c0_29 = arith.constant 0 : index
    %c0_30 = arith.constant 0 : index
    %c0_31 = arith.constant 0 : index
    %31 = vector.load %arg9[%c0_29, %c0_30, %c0_31] : memref<4x8x1xf32, #tpu.memory_space<vmem>>, vector<4x8x1xf32>
    tpu.vector_store %arg9[%c0_29, %c0_30, %c0_31], %10 {strides = array<i32>} : memref<4x8x1xf32, #tpu.memory_space<vmem>>, vector<4x8x1xf32>,
    %c0_i32_32 = arith.constant 0 : i32
    %32 = arith.cmpi eq, %arg3, %c0_i32_32 : i32
    %33 = arith.extui %32 : i1 to i32
    %c0_i32_33 = arith.constant 0 : i32
    %34 = arith.cmpi ne, %33, %c0_i32_33 : i32
    scf.if %34 {
      %c0_34 = arith.constant 0 : index
      %c0_35 = arith.constant 0 : index
      %c0_36 = arith.constant 0 : index
      %35 = vector.load %arg10[%c0_34, %c0_35, %c0_36] : memref<4x8x1xf32, #tpu.memory_space<vmem>>, vector<4x8x1xf32>
      %36 = tpu.reciprocal %35 {approx = true} : vector<4x8x1xf32> -> vector<4x8x1xf32>
      %c0_37 = arith.constant 0 : index
      %c0_38 = arith.constant 0 : index
      %c0_39 = arith.constant 0 : index
      %37 = vector.load %arg11[%c0_37, %c0_38, %c0_39] : memref<4x8x8xf32, #tpu.memory_space<vmem>>, vector<4x8x8xf32>
      %38 = vector.broadcast %36 : vector<4x8x1xf32> to vector<4x8x8xf32>
      %39 = arith.mulf %37, %38 : vector<4x8x8xf32>
      %c0_40 = arith.constant 0 : index
      %c0_41 = arith.constant 0 : index
      %c0_42 = arith.constant 0 : index
      %c0_43 = arith.constant 0 : index
      %40 = vector.load %arg7[%c0_40, %c0_41, %c0_42, %c0_43] : memref<1x4x8x8xf32, #tpu.memory_space<vmem>>, vector<1x4x8x8xf32>
      %41 = vector.shape_cast %40 : vector<1x4x8x8xf32> to vector<4x8x8xf32>
      %42 = vector.shape_cast %39 : vector<4x8x8xf32> to vector<1x4x8x8xf32>
      tpu.vector_store %arg7[%c0_40, %c0_41, %c0_42, %c0_43], %42 {strides = array<i32>} : memref<1x4x8x8xf32, #tpu.memory_space<vmem>>, vector<1x4x8x8xf32>,
    } else {
    }
    return
  }
  func.func @transform_0(%arg0: i32, %arg1: i32, %arg2: i32, %arg3: i32) -> (i32, i32, i32, i32) {
    %c0_i32 = arith.constant 0 : i32
    %c0_i32_0 = arith.constant 0 : i32
    return %arg0, %arg1, %arg2, %c0_i32 : i32, i32, i32, i32
  }
  func.func @transform_1(%arg0: i32, %arg1: i32, %arg2: i32, %arg3: i32) -> (i32, i32, i32, i32) {
    %c0_i32 = arith.constant 0 : i32
    %c0_i32_0 = arith.constant 0 : i32
    return %arg0, %arg1, %c0_i32, %arg3 : i32, i32, i32, i32
  }
  func.func @transform_2(%arg0: i32, %arg1: i32, %arg2: i32, %arg3: i32) -> (i32, i32, i32, i32) {
    %c0_i32 = arith.constant 0 : i32
    %c0_i32_0 = arith.constant 0 : i32
    return %arg0, %arg1, %arg3, %c0_i32 : i32, i32, i32, i32
  }
  func.func @transform_3(%arg0: i32, %arg1: i32, %arg2: i32, %arg3: i32) -> (i32, i32, i32, i32) {
    %c0_i32 = arith.constant 0 : i32
    %c0_i32_0 = arith.constant 0 : i32
    return %arg0, %arg1, %arg2, %c0_i32 : i32, i32, i32, i32
  }
}

</mosaic_0001>

<llo_original>
// kernel: tpu_custom_call.1
$region0: #{tpu_custom_call.1}
  #allocation0 [shape = 'u32[]', space=smem, size = 0x4, offset = 0x4, fixed_abs, tag = 'smem constant byte address 0x4 - core index']
  #allocation1 [shape = 'u32[144,128]{1,0:T(1,128)}', space=vmem, size = 0x12000, scoped, tag = 'internal scratch']
  #allocation2 [shape = 'bf16[4,8,8]{2,1,0:T(8,128)(2,1)}', space=vmem, size = 0x2000, scoped, tag = 'scratch operand']
  #allocation3 [shape = 'f32[4,8,1]{2,1,0:T(8,128)}', space=vmem, size = 0x4000, scoped, tag = 'scratch operand']
  #allocation4 [shape = 'f32[4,8,1]{2,1,0:T(8,128)}', space=vmem, size = 0x4000, scoped, tag = 'scratch operand']
  #allocation5 [shape = 'f32[4,8,8]{2,1,0:T(8,128)}', space=vmem, size = 0x4000, scoped, tag = 'scratch operand']
  %s0 = inlined_call_operand.hbm [shape: bf16[2,4,8,8], index: 0, kind: input, shape index: {}]
  %s1 = inlined_call_operand.hbm [shape: bf16[2,4,8,8], index: 1, kind: input, shape index: {}]
  %s2 = inlined_call_operand.hbm [shape: bf16[2,4,8,8], index: 2, kind: input, shape index: {}]
  %s3 = inlined_call_operand.hbm [shape: f32[2,4,8,8], index: 3, kind: output, shape index: {}]
  %s4 = sld [smem:[#allocation0]]
  $region65: #{tpu_custom_call.1} parent=0
    _
  %s6 = ssub.s32 1, %s4
  %s7 = scalar_select 0, %s6, %s4
  $region1: #{tpu_custom_call.1} parent=0
    #allocation6 [shape = 'u8[16384]{0}', space=vmem, size = 0x4000, scoped, tag = 'input window, operand 0']
    #allocation7 [shape = 's32[2]{0}', space=sflag, size = 0x8, scoped, tag = 'scoped memory for tpu_custom_call.1']
    #allocation8 [shape = 's32[2]{0}', space=sflag, size = 0x8, scoped, tag = 'scoped memory for tpu_custom_call.1']
    #allocation9 [shape = 'u8[16384]{0}', space=vmem, size = 0x4000, scoped, tag = 'input window, operand 1']
    #allocation10 [shape = 's32[2]{0}', space=sflag, size = 0x8, scoped, tag = 'scoped memory for tpu_custom_call.1']
    #allocation11 [shape = 'u8[16384]{0}', space=vmem, size = 0x4000, scoped, tag = 'input window, operand 2']
    #allocation12 [shape = 'u8[32768]{0}', space=vmem, size = 0x8000, scoped, tag = 'output window, operand 0']
    %8 = vsyncpa [#allocation7], 0
    %s9 = scalar_lea.sflag [#allocation7], 1
    %10 = vsyncpa %s9, 0
    %11 = vsyncpa [#allocation10], 0
    %s12 = scalar_lea.sflag [#allocation10], 1
    %13 = vsyncpa %s12, 0
    %14 = vsyncpa [#allocation8], 0
    %s15 = scalar_lea.sflag [#allocation8], 1
    %16 = vsyncpa %s15, 0
    loop: start=0, step=1, limit=4
    $region2: #{tpu_custom_call.1} parent=1 // loop_pre_header
      _
    $region3: #{tpu_custom_call.1} parent=1 // loop_header
      %s18 = sphi 0, %s22
      %p19 = scmp.ge.s32.totalorder %s18, 4
      %s25 = sphi 0, %s51
      %s26 = sphi 0, %s47
      %s27 = sphi 0, %s43
      %s28 = sphi 0, %s39
      %s29 = sphi 0, %s25
      %s30 = sphi 0, %s26
      %s31 = sphi 0, %s27
      %s32 = sphi 0, %s28
      %s33 = sphi 0, %s29
      %s34 = sphi 0, %s30
      %s35 = sphi 0, %s31
      %s36 = sphi 0, %s32
      %s58 = sphi 0, %s60
      %s61 = sphi 0, %s58
      %s62 = sphi 0, %s61
      %s78 = sphi 0, %s62
      %s88 = sphi 0, %s90
      %s91 = sphi 0, %s88
      %s92 = sphi 0, %s91
      %s108 = sphi 0, %s92
      %s118 = sphi 0, %s120
      %s121 = sphi 0, %s118
      %s122 = sphi 0, %s121
      %s138 = sphi 0, %s122
      %s148 = sphi 0, %s150
      %s151 = sphi 0, %s148
      %s152 = sphi 0, %s151
      %s168 = sphi 0, %s152
    $region4: #{tpu_custom_call.1} parent=1 // loop_header_branch
      %21 = sbr.rel (%p19) target = $region8
    $region5: #{tpu_custom_call.1} parent=1 // loop_body
      %s23 = ssub.s32 %s18, 1
      %s24 = ssub.s32 %s18, 2
      %s37 = sadd.s32 1, %s28
      %p38 = scmp.ge.s32.totalorder %s37, 1
      %s39 = scalar_select %p38, 0, %s37
      %s40 = sadd.s32 1, %s27
      %s41 = scalar_select %p38, %s40, %s27
      %p42 = scmp.ge.s32.totalorder %s41, 1
      %s43 = scalar_select %p42, 0, %s41
      %s44 = sadd.s32 1, %s26
      %s45 = scalar_select %p42, %s44, %s26
      %p46 = scmp.ge.s32.totalorder %s45, 1
      %s47 = scalar_select %p46, 0, %s45
      %s48 = sadd.s32 1, %s25
      %s49 = scalar_select %p46, %s48, %s25
      %p50 = scmp.ge.s32.totalorder %s49, 2
      %s51 = scalar_select %p50, 0, %s49
      %s52 = ssub.s32 %s25, %s51
      %s53 = ssub.s32 %s26, %s47
      %s54 = sor.u32 %s52, %s53
      %s55 = ssub.s32 %s27, %s43
      %s56 = sor.u32 %s54, %s55
      %p57 = scmp.eq.s32.totalorder %s56, 0
      %s59 = sadd.s32 %s58, 1
      %s60 = scalar_select %p57, %s58, %s59
      %p63 = pneg %p57
      %p64 = scmp.eq.s32.totalorder %s18, 1
      %p65 = por %p63, %p64
      %p66 = scmp.ne.s32.totalorder %s58, %s61
      %p67 = scmp.eq.s32.totalorder %s18, 0
      %p68 = por %p66, %p67
      %p69 = scmp.ne.s32.totalorder %s58, %s61
      %p70 = scmp.eq.s32.totalorder %s23, 1
      %p71 = por %p69, %p70
      %p72 = scmp.ne.s32.totalorder %s61, %s62
      %p73 = scmp.eq.s32.totalorder %s23, 0
      %p74 = por %p72, %p73
      %p75 = scmp.ne.s32.totalorder %s61, %s62
      %p76 = scmp.eq.s32.totalorder %s24, 1
      %p77 = por %p75, %p76
      %p79 = scmp.ne.s32.totalorder %s62, %s78
      %p80 = scmp.eq.s32.totalorder %s24, 0
      %p81 = por %p79, %p80
      %s82 = ssub.s32 %s25, %s51
      %s83 = ssub.s32 %s26, %s47
      %s84 = sor.u32 %s82, %s83
      %s85 = ssub.s32 %s28, %s39
      %s86 = sor.u32 %s84, %s85
      %p87 = scmp.eq.s32.totalorder %s86, 0
      %s89 = sadd.s32 %s88, 1
      %s90 = scalar_select %p87, %s88, %s89
      %p93 = pneg %p87
      %p94 = scmp.eq.s32.totalorder %s18, 1
      %p95 = por %p93, %p94
      %p96 = scmp.ne.s32.totalorder %s88, %s91
      %p97 = scmp.eq.s32.totalorder %s18, 0
      %p98 = por %p96, %p97
      %p99 = scmp.ne.s32.totalorder %s88, %s91
      %p100 = scmp.eq.s32.totalorder %s23, 1
      %p101 = por %p99, %p100
      %p102 = scmp.ne.s32.totalorder %s91, %s92
      %p103 = scmp.eq.s32.totalorder %s23, 0
      %p104 = por %p102, %p103
      %p105 = scmp.ne.s32.totalorder %s91, %s92
      %p106 = scmp.eq.s32.totalorder %s24, 1
      %p107 = por %p105, %p106
      %p109 = scmp.ne.s32.totalorder %s92, %s108
      %p110 = scmp.eq.s32.totalorder %s24, 0
      %p111 = por %p109, %p110
      %s112 = ssub.s32 %s25, %s51
      %s113 = ssub.s32 %s26, %s47
      %s114 = sor.u32 %s112, %s113
      %s115 = ssub.s32 %s28, %s39
      %s116 = sor.u32 %s114, %s115
      %p117 = scmp.eq.s32.totalorder %s116, 0
      %s119 = sadd.s32 %s118, 1
      %s120 = scalar_select %p117, %s118, %s119
      %p123 = pneg %p117
      %p124 = scmp.eq.s32.totalorder %s18, 1
      %p125 = por %p123, %p124
      %p126 = scmp.ne.s32.totalorder %s118, %s121
      %p127 = scmp.eq.s32.totalorder %s18, 0
      %p128 = por %p126, %p127
      %p129 = scmp.ne.s32.totalorder %s118, %s121
      %p130 = scmp.eq.s32.totalorder %s23, 1
      %p131 = por %p129, %p130
      %p132 = scmp.ne.s32.totalorder %s121, %s122
      %p133 = scmp.eq.s32.totalorder %s23, 0
      %p134 = por %p132, %p133
      %p135 = scmp.ne.s32.totalorder %s121, %s122
      %p136 = scmp.eq.s32.totalorder %s24, 1
      %p137 = por %p135, %p136
      %p139 = scmp.ne.s32.totalorder %s122, %s138
      %p140 = scmp.eq.s32.totalorder %s24, 0
      %p141 = por %p139, %p140
      %s142 = ssub.s32 %s25, %s51
      %s143 = ssub.s32 %s26, %s47
      %s144 = sor.u32 %s142, %s143
      %s145 = ssub.s32 %s27, %s43
      %s146 = sor.u32 %s144, %s145
      %p147 = scmp.eq.s32.totalorder %s146, 0
      %s149 = sadd.s32 %s148, 1
      %s150 = scalar_select %p147, %s148, %s149
      %p153 = pneg %p147
      %p154 = scmp.eq.s32.totalorder %s18, 1
      %p155 = por %p153, %p154
      %p156 = scmp.ne.s32.totalorder %s148, %s151
      %p157 = scmp.eq.s32.totalorder %s18, 0
      %p158 = por %p156, %p157
      %p159 = scmp.ne.s32.totalorder %s148, %s151
      %p160 = scmp.eq.s32.totalorder %s23, 1
      %p161 = por %p159, %p160
      %p162 = scmp.ne.s32.totalorder %s151, %s152
      %p163 = scmp.eq.s32.totalorder %s23, 0
      %p164 = por %p162, %p163
      %p165 = scmp.ne.s32.totalorder %s151, %s152
      %p166 = scmp.eq.s32.totalorder %s24, 1
      %p167 = por %p165, %p166
      %p169 = scmp.ne.s32.totalorder %s152, %s168
      %p170 = scmp.eq.s32.totalorder %s24, 0
      %p171 = por %p169, %p170
      %p172 = scmp.le.s32.totalorder 1, %s18
      %p173 = scmp.lt.s32.totalorder %s18, 3
      %p174 = pnand %p172, %p173
      %p175 = pneg %p174
      // Predicated region
      $region9: #{tpu_custom_call.1} parent=5 // pred_check
        _
      $region10: #{tpu_custom_call.1} parent=5 // pred_check_branch
        %177 = sbr.rel (%p174) target = $region12
      $region11: #{tpu_custom_call.1} parent=5 // pred_region
        %s178 = ssub.s32 %s18, 1
      $region12: #{tpu_custom_call.1} parent=5 // pred_fallthru
        _
      %p179 = scmp.lt.s32.totalorder %s18, 2
      // Predicated region
      $region13: #{tpu_custom_call.1} parent=5 // pred_check
        %p180 = pneg %p179
      $region14: #{tpu_custom_call.1} parent=5 // pred_check_branch
        %182 = sbr.rel (%p180) target = $region16
      $region15: #{tpu_custom_call.1} parent=5 // pred_region
        // Predicated region
        $region17: #{tpu_custom_call.1} parent=15 // pred_check
          %p183 = pneg %p68
        $region18: #{tpu_custom_call.1} parent=15 // pred_check_branch
          %185 = sbr.rel (%p183) target = $region20
        $region19: #{tpu_custom_call.1} parent=15 // pred_region
          %s186 = sand.u32 %s58, 1
          %s187 = scalar_lea.sflag [#allocation7], %s186
          %s188 = sand.u32 %s58, 1
          %s189 = smul.addr %s188, 16
          %s190 = scalar_lea.vmem [#allocation6], %s189
          %s191 = smul.u32 4, %s26
          %s193 = ssub.s32 256, 256
          %194 = vsyncadd %s187, %s193
          %s195 = sadd.s32 %s27, %s191
          %s196 = smul.addr %s25, 4
          %s197 = sadd.s32 %s195, %s196
          %s198 = smul.addr %s197, 64
          %s199 = scalar_lea.hbm %s0, %s198
          %s200 = sshll.u32 %s190, 4
          %s201 = int_to_ptr.vmem [resolvable:$true] %s200
          %206 = dma.hbm_to_vmem [thread:$0]  %s199, 256, %s201, %s187, 64, 64, 4
        $region20: #{tpu_custom_call.1} parent=15 // pred_fallthru
          _
        // Predicated region
        $region21: #{tpu_custom_call.1} parent=15 // pred_check
          %p207 = pneg %p98
        $region22: #{tpu_custom_call.1} parent=15 // pred_check_branch
          %209 = sbr.rel (%p207) target = $region24
        $region23: #{tpu_custom_call.1} parent=15 // pred_region
          %s210 = sand.u32 %s18, 1
          %s211 = scalar_lea.sflag [#allocation10], %s210
          %s212 = sand.u32 %s88, 1
          %s213 = smul.addr %s212, 16
          %s214 = scalar_lea.vmem [#allocation9], %s213
          %s215 = smul.u32 4, %s26
          %s217 = ssub.s32 256, 256
          %218 = vsyncadd %s211, %s217
          %s219 = sadd.s32 %s28, %s215
          %s220 = smul.addr %s25, 4
          %s221 = sadd.s32 %s219, %s220
          %s222 = smul.addr %s221, 64
          %s223 = scalar_lea.hbm %s1, %s222
          %s224 = sshll.u32 %s214, 4
          %s225 = int_to_ptr.vmem [resolvable:$true] %s224
          %230 = dma.hbm_to_vmem [thread:$0]  %s223, 256, %s225, %s211, 64, 64, 4
        $region24: #{tpu_custom_call.1} parent=15 // pred_fallthru
          _
        // Predicated region
        $region25: #{tpu_custom_call.1} parent=15 // pred_check
          %p231 = pneg %p128
        $region26: #{tpu_custom_call.1} parent=15 // pred_check_branch
          %233 = sbr.rel (%p231) target = $region28
        $region27: #{tpu_custom_call.1} parent=15 // pred_region
          %s234 = sand.u32 %s18, 1
          %s235 = scalar_lea.sflag [#allocation10], %s234
          %s236 = sand.u32 %s118, 1
          %s237 = smul.addr %s236, 16
          %s238 = scalar_lea.vmem [#allocation11], %s237
          %s239 = smul.u32 4, %s26
          %s241 = ssub.s32 256, 256
          %242 = vsyncadd %s235, %s241
          %s243 = sadd.s32 %s28, %s239
          %s244 = smul.addr %s25, 4
          %s245 = sadd.s32 %s243, %s244
          %s246 = smul.addr %s245, 64
          %s247 = scalar_lea.hbm %s2, %s246
          %s248 = sshll.u32 %s238, 4
          %s249 = int_to_ptr.vmem [resolvable:$true] %s248
          %254 = dma.hbm_to_vmem [thread:$0]  %s247, 256, %s249, %s235, 64, 64, 4
        $region28: #{tpu_custom_call.1} parent=15 // pred_fallthru
          _
      $region16: #{tpu_custom_call.1} parent=5 // pred_fallthru
        _
      %p255 = scmp.le.s32.totalorder 1, %s18
      %p256 = scmp.lt.s32.totalorder %s18, 3
      %p257 = pnand %p255, %p256
      %p258 = pneg %p257
      // Predicated region
      $region29: #{tpu_custom_call.1} parent=5 // pred_check
        _
      $region30: #{tpu_custom_call.1} parent=5 // pred_check_branch
        %260 = sbr.rel (%p257) target = $region32
      $region31: #{tpu_custom_call.1} parent=5 // pred_region
        %s261 = ssub.s32 %s18, 1
        %s262 = sand.u32 %s61, 1
        %s263 = scalar_lea.sflag [#allocation7], %s262
        %s264 = sand.u32 %s61, 1
        %s265 = smul.addr %s264, 16
        %s266 = scalar_lea.vmem [#allocation6], %s265
        // Predicated region
        $region33: #{tpu_custom_call.1} parent=31 // pred_check
          %p267 = pneg %p74
        $region34: #{tpu_custom_call.1} parent=31 // pred_check_branch
          %269 = sbr.rel (%p267) target = $region36
        $region35: #{tpu_custom_call.1} parent=31 // pred_region
          %270 = dma.done %s263, 256
        $region36: #{tpu_custom_call.1} parent=31 // pred_fallthru
          _
        %s271 = sand.u32 %s23, 1
        %s272 = scalar_lea.sflag [#allocation10], %s271
        %s273 = sand.u32 %s91, 1
        %s274 = smul.addr %s273, 16
        %s275 = scalar_lea.vmem [#allocation9], %s274
        // Predicated region
        $region37: #{tpu_custom_call.1} parent=31 // pred_check
          %p276 = pneg %p104
        $region38: #{tpu_custom_call.1} parent=31 // pred_check_branch
          %278 = sbr.rel (%p276) target = $region40
        $region39: #{tpu_custom_call.1} parent=31 // pred_region
          %279 = dma.done %s272, 256
        $region40: #{tpu_custom_call.1} parent=31 // pred_fallthru
          _
        %s280 = sand.u32 %s23, 1
        %s281 = scalar_lea.sflag [#allocation10], %s280
        %s282 = sand.u32 %s121, 1
        %s283 = smul.addr %s282, 16
        %s284 = scalar_lea.vmem [#allocation11], %s283
        // Predicated region
        $region41: #{tpu_custom_call.1} parent=31 // pred_check
          %p285 = pneg %p134
        $region42: #{tpu_custom_call.1} parent=31 // pred_check_branch
          %287 = sbr.rel (%p285) target = $region44
        $region43: #{tpu_custom_call.1} parent=31 // pred_region
          %288 = dma.done %s281, 256
        $region44: #{tpu_custom_call.1} parent=31 // pred_fallthru
          _
        %s289 = sand.u32 %s61, 1
        %s290 = scalar_lea.sflag [#allocation7], %s289
        %s291 = sand.u32 %s61, 1
        %s292 = smul.addr %s291, 16
        %s293 = scalar_lea.vmem [#allocation6], %s292
        %p294 = pneg %p74
        %p295 = pneg %p71
        %s296 = sand.u32 %s23, 1
        %s297 = scalar_lea.sflag [#allocation10], %s296
        %s298 = sand.u32 %s91, 1
        %s299 = smul.addr %s298, 16
        %s300 = scalar_lea.vmem [#allocation9], %s299
        %p301 = pneg %p104
        %p302 = pneg %p101
        %s303 = sand.u32 %s23, 1
        %s304 = scalar_lea.sflag [#allocation10], %s303
        %s305 = sand.u32 %s121, 1
        %s306 = smul.addr %s305, 16
        %s307 = scalar_lea.vmem [#allocation11], %s306
        %p308 = pneg %p134
        %p309 = pneg %p131
        %p310 = pneg %p164
        %p311 = pneg %p161
        %s312 = sand.u32 %s151, 1
        %s313 = scalar_lea.sflag [#allocation8], %s312
        %s314 = sand.u32 %s151, 1
        %s315 = smul.addr %s314, 32
        %s316 = scalar_lea.vmem [#allocation12], %s315
        %s317 = smul.u32 4, %s30
        %s318 = smul.u32 4, %s30
        %s319 = smul.u32 4, %s30
        %s320 = smul.u32 4, %s30
        %p323 = scmp.eq.s32.totalorder %s32, 0
        // Predicated region
        $region45: #{tpu_custom_call.1} parent=31 // pred_check
          %p324 = pneg %p323
        $region46: #{tpu_custom_call.1} parent=31 // pred_check_branch
          %326 = sbr.rel (%p324) target = $region48
        $region47: #{tpu_custom_call.1} parent=31 // pred_region
          %v327 = vld [vmem:[%s266] sm:$0xf]
          %v328 = vld [vmem:[%s266 + $0x4] sm:$0xf]
          %v329 = vld [vmem:[%s266 + $0x8] sm:$0xf]
          %v330 = vld [vmem:[%s266 + $0xc] sm:$0xf]
          %v331 = vmul.bf16 %v327, 1052065461
          %v332 = vmul.bf16 %v328, 1052065461
          %v333 = vmul.bf16 %v329, 1052065461
          %v334 = vmul.bf16 %v330, 1052065461
          %vm335 = vcmask 60416
          %336 = vst.msk [vmem:[#allocation2] sm:$0xf] %vm335, %v331
          %337 = vst.msk [vmem:[#allocation2 + $0x4] sm:$0xf] %vm335, %v332
          %338 = vst.msk [vmem:[#allocation2 + $0x8] sm:$0xf] %vm335, %v333
          %339 = vst.msk [vmem:[#allocation2 + $0xc] sm:$0xf] %vm335, %v334
          %vm340 = vcmask 7168
          %341 = vst.msk [vmem:[#allocation3] sm:$0xff] %vm340, -inf
          %342 = vst.msk [vmem:[#allocation3 + $0x8] sm:$0xff] %vm340, -inf
          %343 = vst.msk [vmem:[#allocation3 + $0x10] sm:$0xff] %vm340, -inf
          %344 = vst.msk [vmem:[#allocation3 + $0x18] sm:$0xff] %vm340, -inf
          %345 = vst.msk [vmem:[#allocation4] sm:$0xff] %vm340, 0.0
          %346 = vst.msk [vmem:[#allocation4 + $0x8] sm:$0xff] %vm340, 0.0
          %347 = vst.msk [vmem:[#allocation4 + $0x10] sm:$0xff] %vm340, 0.0
          %348 = vst.msk [vmem:[#allocation4 + $0x18] sm:$0xff] %vm340, 0.0
          %vm349 = vcmask 64512
          %350 = vst.msk [vmem:[#allocation5] sm:$0xff] %vm349, 0.0
          %351 = vst.msk [vmem:[#allocation5 + $0x8] sm:$0xff] %vm349, 0.0
          %352 = vst.msk [vmem:[#allocation5 + $0x10] sm:$0xff] %vm349, 0.0
          %353 = vst.msk [vmem:[#allocation5 + $0x18] sm:$0xff] %vm349, 0.0
        $region48: #{tpu_custom_call.1} parent=31 // pred_fallthru
          _
        %v354 = vld [vmem:[#allocation2] sm:$0xf]
        %v355 = vld [vmem:[#allocation2 + $0x4] sm:$0xf]
        %v356 = vld [vmem:[#allocation2 + $0x8] sm:$0xf]
        %v357 = vld [vmem:[#allocation2 + $0xc] sm:$0xf]
        %v358 = vld [vmem:[%s275] sm:$0xf]
        %v359 = vld [vmem:[%s275 + $0x4] sm:$0xf]
        %v360 = vld [vmem:[%s275 + $0x8] sm:$0xf]
        %v361 = vld [vmem:[%s275 + $0xc] sm:$0xf]
        %vm362 = vcmask 64512
        %v364 = vsel %vm362, %v354, 0
        %vm366 = vcmask 1043456
        %v368 = vsel %vm366, %v358, 0
        %370 = vmatprep.subr.bf16.mxu0 0
        %371 = vmatpush1.bf16.msra.mxu0 0
        %372 = vmatprep.subr.bf16.mxu0 0
        %373 = vmatpush1.bf16.msra.mxu0 0
        %374 = vmatprep.subr.bf16.mxu0 0
        %375 = vmatpush1.bf16.msra.mxu0 0
        %376 = vmatprep.subr.bf16.mxu0 0
        %377 = vmatpush1.bf16.msra.mxu0 0
        %378 = vmatprep.subr.bf16.mxu0 0
        %379 = vmatpush1.bf16.msra.mxu0 0
        %380 = vmatprep.subr.bf16.mxu0 0
        %381 = vmatpush1.bf16.msra.mxu0 0
        %382 = vmatprep.subr.bf16.mxu0 0
        %383 = vmatpush1.bf16.msra.mxu0 0
        %384 = vmatprep.subr.bf16.mxu0 0
        %385 = vmatpush1.bf16.msra.mxu0 %v368
        %386 = vmatprep.subr.bf16.mxu0 0
        %387 = vmatpush2.bf16.msra.mxu0 0
        %388 = vmatprep.subr.bf16.mxu0 0
        %389 = vmatpush2.bf16.msra.mxu0 0
        %390 = vmatprep.subr.bf16.mxu0 0
        %391 = vmatpush2.bf16.msra.mxu0 0
        %392 = vmatprep.subr.bf16.mxu0 0
        %393 = vmatpush2.bf16.msra.mxu0 0
        %394 = vmatprep.subr.bf16.mxu0 0
        %395 = vmatpush2.bf16.msra.mxu0 0
        %396 = vmatprep.subr.bf16.mxu0 0
        %397 = vmatpush2.bf16.msra.mxu0 0
        %398 = vmatprep.subr.bf16.mxu0 0
        %399 = vmatpush2.bf16.msra.mxu0 0
        %400 = vmatprep.subr.bf16.mxu0 0
        %401 = vmatpush2.bf16.msra.mxu0 0
        %402 = vmatprep.mubr.bf16.mxu0 0
        %403 = vmatmul.mubr.bf16.gmra.mxu0 %v364
        %v404 = vpop.f32.mrf.mxu0
        %v405 = vadd.f32 0.0, %v404
        %v406 = vpop.f32.mrf.mxu0
        %v407 = vpop.f32.mrf.mxu0
        %v408 = vpop.f32.mrf.mxu0
        %409 = vdwg.mxu0
        %v411 = vsel %vm362, %v355, 0
        %v414 = vsel %vm366, %v359, 0
        %416 = vmatprep.subr.bf16.mxu0 0
        %417 = vmatpush1.bf16.msra.mxu0 0
        %418 = vmatprep.subr.bf16.mxu0 0
        %419 = vmatpush1.bf16.msra.mxu0 0
        %420 = vmatprep.subr.bf16.mxu0 0
        %421 = vmatpush1.bf16.msra.mxu0 0
        %422 = vmatprep.subr.bf16.mxu0 0
        %423 = vmatpush1.bf16.msra.mxu0 0
        %424 = vmatprep.subr.bf16.mxu0 0
        %425 = vmatpush1.bf16.msra.mxu0 0
        %426 = vmatprep.subr.bf16.mxu0 0
        %427 = vmatpush1.bf16.msra.mxu0 0
        %428 = vmatprep.subr.bf16.mxu0 0
        %429 = vmatpush1.bf16.msra.mxu0 0
        %430 = vmatprep.subr.bf16.mxu0 0
        %431 = vmatpush1.bf16.msra.mxu0 %v414
        %432 = vmatprep.subr.bf16.mxu0 0
        %433 = vmatpush2.bf16.msra.mxu0 0
        %434 = vmatprep.subr.bf16.mxu0 0
        %435 = vmatpush2.bf16.msra.mxu0 0
        %436 = vmatprep.subr.bf16.mxu0 0
        %437 = vmatpush2.bf16.msra.mxu0 0
        %438 = vmatprep.subr.bf16.mxu0 0
        %439 = vmatpush2.bf16.msra.mxu0 0
        %440 = vmatprep.subr.bf16.mxu0 0
        %441 = vmatpush2.bf16.msra.mxu0 0
        %442 = vmatprep.subr.bf16.mxu0 0
        %443 = vmatpush2.bf16.msra.mxu0 0
        %444 = vmatprep.subr.bf16.mxu0 0
        %445 = vmatpush2.bf16.msra.mxu0 0
        %446 = vmatprep.subr.bf16.mxu0 0
        %447 = vmatpush2.bf16.msra.mxu0 0
        %448 = vmatprep.mubr.bf16.mxu0 0
        %449 = vmatmul.mubr.bf16.gmra.mxu0 %v411
        %v450 = vpop.f32.mrf.mxu0
        %v451 = vadd.f32 0.0, %v450
        %v452 = vpop.f32.mrf.mxu0
        %v453 = vpop.f32.mrf.mxu0
        %v454 = vpop.f32.mrf.mxu0
        %455 = vdwg.mxu0
        %v457 = vsel %vm362, %v356, 0
        %v460 = vsel %vm366, %v360, 0
        %462 = vmatprep.subr.bf16.mxu0 0
        %463 = vmatpush1.bf16.msra.mxu0 0
        %464 = vmatprep.subr.bf16.mxu0 0
        %465 = vmatpush1.bf16.msra.mxu0 0
        %466 = vmatprep.subr.bf16.mxu0 0
        %467 = vmatpush1.bf16.msra.mxu0 0
        %468 = vmatprep.subr.bf16.mxu0 0
        %469 = vmatpush1.bf16.msra.mxu0 0
        %470 = vmatprep.subr.bf16.mxu0 0
        %471 = vmatpush1.bf16.msra.mxu0 0
        %472 = vmatprep.subr.bf16.mxu0 0
        %473 = vmatpush1.bf16.msra.mxu0 0
        %474 = vmatprep.subr.bf16.mxu0 0
        %475 = vmatpush1.bf16.msra.mxu0 0
        %476 = vmatprep.subr.bf16.mxu0 0
        %477 = vmatpush1.bf16.msra.mxu0 %v460
        %478 = vmatprep.subr.bf16.mxu0 0
        %479 = vmatpush2.bf16.msra.mxu0 0
        %480 = vmatprep.subr.bf16.mxu0 0
        %481 = vmatpush2.bf16.msra.mxu0 0
        %482 = vmatprep.subr.bf16.mxu0 0
        %483 = vmatpush2.bf16.msra.mxu0 0
        %484 = vmatprep.subr.bf16.mxu0 0
        %485 = vmatpush2.bf16.msra.mxu0 0
        %486 = vmatprep.subr.bf16.mxu0 0
        %487 = vmatpush2.bf16.msra.mxu0 0
        %488 = vmatprep.subr.bf16.mxu0 0
        %489 = vmatpush2.bf16.msra.mxu0 0
        %490 = vmatprep.subr.bf16.mxu0 0
        %491 = vmatpush2.bf16.msra.mxu0 0
        %492 = vmatprep.subr.bf16.mxu0 0
        %493 = vmatpush2.bf16.msra.mxu0 0
        %494 = vmatprep.mubr.bf16.mxu0 0
        %495 = vmatmul.mubr.bf16.gmra.mxu0 %v457
        %v496 = vpop.f32.mrf.mxu0
        %v497 = vadd.f32 0.0, %v496
        %v498 = vpop.f32.mrf.mxu0
        %v499 = vpop.f32.mrf.mxu0
        %v500 = vpop.f32.mrf.mxu0
        %501 = vdwg.mxu0
        %v503 = vsel %vm362, %v357, 0
        %v506 = vsel %vm366, %v361, 0
        %508 = vmatprep.subr.bf16.mxu0 0
        %509 = vmatpush1.bf16.msra.mxu0 0
        %510 = vmatprep.subr.bf16.mxu0 0
        %511 = vmatpush1.bf16.msra.mxu0 0
        %512 = vmatprep.subr.bf16.mxu0 0
        %513 = vmatpush1.bf16.msra.mxu0 0
        %514 = vmatprep.subr.bf16.mxu0 0
        %515 = vmatpush1.bf16.msra.mxu0 0
        %516 = vmatprep.subr.bf16.mxu0 0
        %517 = vmatpush1.bf16.msra.mxu0 0
        %518 = vmatprep.subr.bf16.mxu0 0
        %519 = vmatpush1.bf16.msra.mxu0 0
        %520 = vmatprep.subr.bf16.mxu0 0
        %521 = vmatpush1.bf16.msra.mxu0 0
        %522 = vmatprep.subr.bf16.mxu0 0
        %523 = vmatpush1.bf16.msra.mxu0 %v506
        %524 = vmatprep.subr.bf16.mxu0 0
        %525 = vmatpush2.bf16.msra.mxu0 0
        %526 = vmatprep.subr.bf16.mxu0 0
        %527 = vmatpush2.bf16.msra.mxu0 0
        %528 = vmatprep.subr.bf16.mxu0 0
        %529 = vmatpush2.bf16.msra.mxu0 0
        %530 = vmatprep.subr.bf16.mxu0 0
        %531 = vmatpush2.bf16.msra.mxu0 0
        %532 = vmatprep.subr.bf16.mxu0 0
        %533 = vmatpush2.bf16.msra.mxu0 0
        %534 = vmatprep.subr.bf16.mxu0 0
        %535 = vmatpush2.bf16.msra.mxu0 0
        %536 = vmatprep.subr.bf16.mxu0 0
        %537 = vmatpush2.bf16.msra.mxu0 0
        %538 = vmatprep.subr.bf16.mxu0 0
        %539 = vmatpush2.bf16.msra.mxu0 0
        %540 = vmatprep.mubr.bf16.mxu0 0
        %541 = vmatmul.mubr.bf16.gmra.mxu0 %v503
        %v542 = vpop.f32.mrf.mxu0
        %v543 = vadd.f32 0.0, %v542
        %v544 = vpop.f32.mrf.mxu0
        %v545 = vpop.f32.mrf.mxu0
        %v546 = vpop.f32.mrf.mxu0
        %547 = vdwg.mxu0
        %v548 = vld [vmem:[#allocation3] sm:$0xff]
        %v549 = vld [vmem:[#allocation3 + $0x8] sm:$0xff]
        %v550 = vld [vmem:[#allocation3 + $0x10] sm:$0xff]
        %v551 = vld [vmem:[#allocation3 + $0x18] sm:$0xff]
        %v552 = vsel %vm362, %v405, -inf
        %553 = vmax.xlane.f32.xlu0 %v552
        %v554 = vpop.xlane.xlu0 %553
        %v555 = vsel %vm362, %v451, -inf
        %556 = vmax.xlane.f32.xlu0 %v555
        %v557 = vpop.xlane.xlu0 %556
        %v558 = vsel %vm362, %v497, -inf
        %559 = vmax.xlane.f32.xlu0 %v558
        %v560 = vpop.xlane.xlu0 %559
        %v561 = vsel %vm362, %v543, -inf
        %562 = vmax.xlane.f32.xlu0 %v561
        %v563 = vpop.xlane.xlu0 %562
        %v564 = vmax.f32 %v548, %v554
        %v565 = vmax.f32 %v549, %v557
        %v566 = vmax.f32 %v550, %v560
        %v567 = vmax.f32 %v551, %v563
        %v568 = vsub.f32 %v548, %v564
        %v569 = vsub.f32 %v549, %v565
        %v570 = vsub.f32 %v550, %v566
        %v571 = vsub.f32 %v551, %v567
        %v572 = vmul.f32 %v568, 1.442695
        %v573 = vpow.pop %v572
        %v574 = vmul.f32 %v569, 1.442695
        %v575 = vpow.pop %v574
        %v576 = vmul.f32 %v570, 1.442695
        %v577 = vpow.pop %v576
        %v578 = vmul.f32 %v571, 1.442695
        %v579 = vpow.pop %v578
        %581 = vset.pattern.permute.xlu0 0
        %582 = vperm.xlu0 %581, %v564
        %v583 = vpop.permute.xlu0 %582
        %586 = vset.pattern.permute.xlu0 0
        %587 = vperm.xlu0 %586, %v565
        %v588 = vpop.permute.xlu0 %587
        %591 = vset.pattern.permute.xlu0 0
        %592 = vperm.xlu0 %591, %v566
        %v593 = vpop.permute.xlu0 %592
        %596 = vset.pattern.permute.xlu0 0
        %597 = vperm.xlu0 %596, %v567
        %v598 = vpop.permute.xlu0 %597
        %v600 = vsub.f32 %v405, %v583
        %v601 = vsub.f32 %v451, %v588
        %v602 = vsub.f32 %v497, %v593
        %v603 = vsub.f32 %v543, %v598
        %v604 = vmul.f32 %v600, 1.442695
        %v605 = vpow.pop %v604
        %v606 = vmul.f32 %v601, 1.442695
        %v607 = vpow.pop %v606
        %v608 = vmul.f32 %v602, 1.442695
        %v609 = vpow.pop %v608
        %v610 = vmul.f32 %v603, 1.442695
        %v611 = vpow.pop %v610
        %v612 = vld [vmem:[#allocation4] sm:$0xff]
        %v613 = vld [vmem:[#allocation4 + $0x8] sm:$0xff]
        %v614 = vld [vmem:[#allocation4 + $0x10] sm:$0xff]
        %v615 = vld [vmem:[#allocation4 + $0x18] sm:$0xff]
        %v616 = vmul.f32 %v573, %v612
        %v617 = vmul.f32 %v575, %v613
        %v618 = vmul.f32 %v577, %v614
        %v619 = vmul.f32 %v579, %v615
        %v620 = vsel %vm362, %v605, 0.0
        %621 = vadd.xlane.f32.xlu0 %v620
        %v622 = vpop.xlane.xlu0 %621
        %v623 = vsel %vm362, %v607, 0.0
        %624 = vadd.xlane.f32.xlu0 %v623
        %v625 = vpop.xlane.xlu0 %624
        %v626 = vsel %vm362, %v609, 0.0
        %627 = vadd.xlane.f32.xlu0 %v626
        %v628 = vpop.xlane.xlu0 %627
        %v629 = vsel %vm362, %v611, 0.0
        %630 = vadd.xlane.f32.xlu0 %v629
        %v631 = vpop.xlane.xlu0 %630
        %v632 = vadd.f32 %v616, %v622
        %v633 = vadd.f32 %v617, %v625
        %v634 = vadd.f32 %v618, %v628
        %v635 = vadd.f32 %v619, %v631
        %vm636 = vcmask 7168
        %637 = vst.msk [vmem:[#allocation4] sm:$0xff] %vm636, %v632
        %638 = vst.msk [vmem:[#allocation4 + $0x8] sm:$0xff] %vm636, %v633
        %639 = vst.msk [vmem:[#allocation4 + $0x10] sm:$0xff] %vm636, %v634
        %640 = vst.msk [vmem:[#allocation4 + $0x18] sm:$0xff] %vm636, %v635
        %v641 = vld [vmem:[#allocation5] sm:$0xff]
        %v642 = vld [vmem:[#allocation5 + $0x8] sm:$0xff]
        %v643 = vld [vmem:[#allocation5 + $0x10] sm:$0xff]
        %v644 = vld [vmem:[#allocation5 + $0x18] sm:$0xff]
        %646 = vset.pattern.permute.xlu0 0
        %647 = vperm.xlu0 %646, %v573
        %v648 = vpop.permute.xlu0 %647
        %651 = vset.pattern.permute.xlu0 0
        %652 = vperm.xlu0 %651, %v575
        %v653 = vpop.permute.xlu0 %652
        %656 = vset.pattern.permute.xlu0 0
        %657 = vperm.xlu0 %656, %v577
        %v658 = vpop.permute.xlu0 %657
        %661 = vset.pattern.permute.xlu0 0
        %662 = vperm.xlu0 %661, %v579
        %v663 = vpop.permute.xlu0 %662
        %v665 = vmul.f32 %v648, %v641
        %v666 = vmul.f32 %v653, %v642
        %v667 = vmul.f32 %v658, %v643
        %v668 = vmul.f32 %v663, %v644
        %v669 = vpack.c.bf16 %v605, %v605
        %v670 = vpack.c.bf16 %v607, %v607
        %v671 = vpack.c.bf16 %v609, %v609
        %v672 = vpack.c.bf16 %v611, %v611
        %v673 = vld [vmem:[%s284] sm:$0xf]
        %v674 = vld [vmem:[%s284 + $0x4] sm:$0xf]
        %v675 = vld [vmem:[%s284 + $0x8] sm:$0xf]
        %v676 = vld [vmem:[%s284 + $0xc] sm:$0xf]
        %v678 = vsel %vm362, %v669, 0
        %v681 = vsel %vm366, %v673, 0
        %683 = vmatprep.subr.bf16.mxu0 0
        %684 = vmatpush1.bf16.msra.mxu0 0
        %685 = vmatprep.subr.bf16.mxu0 0
        %686 = vmatpush1.bf16.msra.mxu0 0
        %687 = vmatprep.subr.bf16.mxu0 0
        %688 = vmatpush1.bf16.msra.mxu0 0
        %689 = vmatprep.subr.bf16.mxu0 0
        %690 = vmatpush1.bf16.msra.mxu0 0
        %691 = vmatprep.subr.bf16.mxu0 0
        %692 = vmatpush1.bf16.msra.mxu0 0
        %693 = vmatprep.subr.bf16.mxu0 0
        %694 = vmatpush1.bf16.msra.mxu0 0
        %695 = vmatprep.subr.bf16.mxu0 0
        %696 = vmatpush1.bf16.msra.mxu0 0
        %697 = vmatprep.subr.bf16.mxu0 0
        %698 = vmatpush1.bf16.msra.mxu0 %v681
        %699 = vmatprep.subr.bf16.mxu0 0
        %700 = vmatpush2.bf16.msra.mxu0 0
        %701 = vmatprep.subr.bf16.mxu0 0
        %702 = vmatpush2.bf16.msra.mxu0 0
        %703 = vmatprep.subr.bf16.mxu0 0
        %704 = vmatpush2.bf16.msra.mxu0 0
        %705 = vmatprep.subr.bf16.mxu0 0
        %706 = vmatpush2.bf16.msra.mxu0 0
        %707 = vmatprep.subr.bf16.mxu0 0
        %708 = vmatpush2.bf16.msra.mxu0 0
        %709 = vmatprep.subr.bf16.mxu0 0
        %710 = vmatpush2.bf16.msra.mxu0 0
        %711 = vmatprep.subr.bf16.mxu0 0
        %712 = vmatpush2.bf16.msra.mxu0 0
        %713 = vmatprep.subr.bf16.mxu0 0
        %714 = vmatpush2.bf16.msra.mxu0 0
        %715 = vmatprep.mubr.bf16.mxu0 0
        %716 = vmatmul.mubr.bf16.gmra.mxu0 %v678
        %v717 = vpop.f32.mrf.mxu0
        %v718 = vadd.f32 0.0, %v717
        %v719 = vpop.f32.mrf.mxu0
        %v720 = vpop.f32.mrf.mxu0
        %v721 = vpop.f32.mrf.mxu0
        %722 = vdwg.mxu0
        %v724 = vsel %vm362, %v670, 0
        %v727 = vsel %vm366, %v674, 0
        %729 = vmatprep.subr.bf16.mxu0 0
        %730 = vmatpush1.bf16.msra.mxu0 0
        %731 = vmatprep.subr.bf16.mxu0 0
        %732 = vmatpush1.bf16.msra.mxu0 0
        %733 = vmatprep.subr.bf16.mxu0 0
        %734 = vmatpush1.bf16.msra.mxu0 0
        %735 = vmatprep.subr.bf16.mxu0 0
        %736 = vmatpush1.bf16.msra.mxu0 0
        %737 = vmatprep.subr.bf16.mxu0 0
        %738 = vmatpush1.bf16.msra.mxu0 0
        %739 = vmatprep.subr.bf16.mxu0 0
        %740 = vmatpush1.bf16.msra.mxu0 0
        %741 = vmatprep.subr.bf16.mxu0 0
        %742 = vmatpush1.bf16.msra.mxu0 0
        %743 = vmatprep.subr.bf16.mxu0 0
        %744 = vmatpush1.bf16.msra.mxu0 %v727
        %745 = vmatprep.subr.bf16.mxu0 0
        %746 = vmatpush2.bf16.msra.mxu0 0
        %747 = vmatprep.subr.bf16.mxu0 0
        %748 = vmatpush2.bf16.msra.mxu0 0
        %749 = vmatprep.subr.bf16.mxu0 0
        %750 = vmatpush2.bf16.msra.mxu0 0
        %751 = vmatprep.subr.bf16.mxu0 0
        %752 = vmatpush2.bf16.msra.mxu0 0
        %753 = vmatprep.subr.bf16.mxu0 0
        %754 = vmatpush2.bf16.msra.mxu0 0
        %755 = vmatprep.subr.bf16.mxu0 0
        %756 = vmatpush2.bf16.msra.mxu0 0
        %757 = vmatprep.subr.bf16.mxu0 0
        %758 = vmatpush2.bf16.msra.mxu0 0
        %759 = vmatprep.subr.bf16.mxu0 0
        %760 = vmatpush2.bf16.msra.mxu0 0
        %761 = vmatprep.mubr.bf16.mxu0 0
        %762 = vmatmul.mubr.bf16.gmra.mxu0 %v724
        %v763 = vpop.f32.mrf.mxu0
        %v764 = vadd.f32 0.0, %v763
        %v765 = vpop.f32.mrf.mxu0
        %v766 = vpop.f32.mrf.mxu0
        %v767 = vpop.f32.mrf.mxu0
        %768 = vdwg.mxu0
        %v770 = vsel %vm362, %v671, 0
        %v773 = vsel %vm366, %v675, 0
        %775 = vmatprep.subr.bf16.mxu0 0
        %776 = vmatpush1.bf16.msra.mxu0 0
        %777 = vmatprep.subr.bf16.mxu0 0
        %778 = vmatpush1.bf16.msra.mxu0 0
        %779 = vmatprep.subr.bf16.mxu0 0
        %780 = vmatpush1.bf16.msra.mxu0 0
        %781 = vmatprep.subr.bf16.mxu0 0
        %782 = vmatpush1.bf16.msra.mxu0 0
        %783 = vmatprep.subr.bf16.mxu0 0
        %784 = vmatpush1.bf16.msra.mxu0 0
        %785 = vmatprep.subr.bf16.mxu0 0
        %786 = vmatpush1.bf16.msra.mxu0 0
        %787 = vmatprep.subr.bf16.mxu0 0
        %788 = vmatpush1.bf16.msra.mxu0 0
        %789 = vmatprep.subr.bf16.mxu0 0
        %790 = vmatpush1.bf16.msra.mxu0 %v773
        %791 = vmatprep.subr.bf16.mxu0 0
        %792 = vmatpush2.bf16.msra.mxu0 0
        %793 = vmatprep.subr.bf16.mxu0 0
        %794 = vmatpush2.bf16.msra.mxu0 0
        %795 = vmatprep.subr.bf16.mxu0 0
        %796 = vmatpush2.bf16.msra.mxu0 0
        %797 = vmatprep.subr.bf16.mxu0 0
        %798 = vmatpush2.bf16.msra.mxu0 0
        %799 = vmatprep.subr.bf16.mxu0 0
        %800 = vmatpush2.bf16.msra.mxu0 0
        %801 = vmatprep.subr.bf16.mxu0 0
        %802 = vmatpush2.bf16.msra.mxu0 0
        %803 = vmatprep.subr.bf16.mxu0 0
        %804 = vmatpush2.bf16.msra.mxu0 0
        %805 = vmatprep.subr.bf16.mxu0 0
        %806 = vmatpush2.bf16.msra.mxu0 0
        %807 = vmatprep.mubr.bf16.mxu0 0
        %808 = vmatmul.mubr.bf16.gmra.mxu0 %v770
        %v809 = vpop.f32.mrf.mxu0
        %v810 = vadd.f32 0.0, %v809
        %v811 = vpop.f32.mrf.mxu0
        %v812 = vpop.f32.mrf.mxu0
        %v813 = vpop.f32.mrf.mxu0
        %814 = vdwg.mxu0
        %v816 = vsel %vm362, %v672, 0
        %v819 = vsel %vm366, %v676, 0
        %821 = vmatprep.subr.bf16.mxu0 0
        %822 = vmatpush1.bf16.msra.mxu0 0
        %823 = vmatprep.subr.bf16.mxu0 0
        %824 = vmatpush1.bf16.msra.mxu0 0
        %825 = vmatprep.subr.bf16.mxu0 0
        %826 = vmatpush1.bf16.msra.mxu0 0
        %827 = vmatprep.subr.bf16.mxu0 0
        %828 = vmatpush1.bf16.msra.mxu0 0
        %829 = vmatprep.subr.bf16.mxu0 0
        %830 = vmatpush1.bf16.msra.mxu0 0
        %831 = vmatprep.subr.bf16.mxu0 0
        %832 = vmatpush1.bf16.msra.mxu0 0
        %833 = vmatprep.subr.bf16.mxu0 0
        %834 = vmatpush1.bf16.msra.mxu0 0
        %835 = vmatprep.subr.bf16.mxu0 0
        %836 = vmatpush1.bf16.msra.mxu0 %v819
        %837 = vmatprep.subr.bf16.mxu0 0
        %838 = vmatpush2.bf16.msra.mxu0 0
        %839 = vmatprep.subr.bf16.mxu0 0
        %840 = vmatpush2.bf16.msra.mxu0 0
        %841 = vmatprep.subr.bf16.mxu0 0
        %842 = vmatpush2.bf16.msra.mxu0 0
        %843 = vmatprep.subr.bf16.mxu0 0
        %844 = vmatpush2.bf16.msra.mxu0 0
        %845 = vmatprep.subr.bf16.mxu0 0
        %846 = vmatpush2.bf16.msra.mxu0 0
        %847 = vmatprep.subr.bf16.mxu0 0
        %848 = vmatpush2.bf16.msra.mxu0 0
        %849 = vmatprep.subr.bf16.mxu0 0
        %850 = vmatpush2.bf16.msra.mxu0 0
        %851 = vmatprep.subr.bf16.mxu0 0
        %852 = vmatpush2.bf16.msra.mxu0 0
        %853 = vmatprep.mubr.bf16.mxu0 0
        %854 = vmatmul.mubr.bf16.gmra.mxu0 %v816
        %v855 = vpop.f32.mrf.mxu0
        %v856 = vadd.f32 0.0, %v855
        %v857 = vpop.f32.mrf.mxu0
        %v858 = vpop.f32.mrf.mxu0
        %v859 = vpop.f32.mrf.mxu0
        %860 = vdwg.mxu0
        %v861 = vadd.f32 %v665, %v718
        %v862 = vadd.f32 %v666, %v764
        %v863 = vadd.f32 %v667, %v810
        %v864 = vadd.f32 %v668, %v856
        %865 = vst.msk [vmem:[#allocation5] sm:$0xff] %vm362, %v861
        %866 = vst.msk [vmem:[#allocation5 + $0x8] sm:$0xff] %vm362, %v862
        %867 = vst.msk [vmem:[#allocation5 + $0x10] sm:$0xff] %vm362, %v863
        %868 = vst.msk [vmem:[#allocation5 + $0x18] sm:$0xff] %vm362, %v864
        %869 = vst.msk [vmem:[#allocation3] sm:$0xff] %vm636, %v564
        %870 = vst.msk [vmem:[#allocation3 + $0x8] sm:$0xff] %vm636, %v565
        %871 = vst.msk [vmem:[#allocation3 + $0x10] sm:$0xff] %vm636, %v566
        %872 = vst.msk [vmem:[#allocation3 + $0x18] sm:$0xff] %vm636, %v567
        // Predicated region
        $region49: #{tpu_custom_call.1} parent=31 // pred_check
          %p873 = pneg %p323
        $region50: #{tpu_custom_call.1} parent=31 // pred_check_branch
          %875 = sbr.rel (%p873) target = $region52
        $region51: #{tpu_custom_call.1} parent=31 // pred_region
          %v876 = vld [vmem:[#allocation4] sm:$0xff]
          %v877 = vld [vmem:[#allocation4 + $0x8] sm:$0xff]
          %v878 = vld [vmem:[#allocation4 + $0x10] sm:$0xff]
          %v879 = vld [vmem:[#allocation4 + $0x18] sm:$0xff]
          %v880 = vrcp.pop %v876
          %v881 = vrcp.pop %v877
          %v882 = vrcp.pop %v878
          %v883 = vrcp.pop %v879
          %v884 = vld [vmem:[#allocation5] sm:$0xff]
          %v885 = vld [vmem:[#allocation5 + $0x8] sm:$0xff]
          %v886 = vld [vmem:[#allocation5 + $0x10] sm:$0xff]
          %v887 = vld [vmem:[#allocation5 + $0x18] sm:$0xff]
          %889 = vset.pattern.permute.xlu0 0
          %890 = vperm.xlu0 %889, %v880
          %v891 = vpop.permute.xlu0 %890
          %894 = vset.pattern.permute.xlu0 0
          %895 = vperm.xlu0 %894, %v881
          %v896 = vpop.permute.xlu0 %895
          %899 = vset.pattern.permute.xlu0 0
          %900 = vperm.xlu0 %899, %v882
          %v901 = vpop.permute.xlu0 %900
          %904 = vset.pattern.permute.xlu0 0
          %905 = vperm.xlu0 %904, %v883
          %v906 = vpop.permute.xlu0 %905
          %v908 = vmul.f32 %v884, %v891
          %v909 = vmul.f32 %v885, %v896
          %v910 = vmul.f32 %v886, %v901
          %v911 = vmul.f32 %v887, %v906
          %912 = vst.msk [vmem:[%s316] sm:$0xff] %vm362, %v908
          %913 = vst.msk [vmem:[%s316 + $0x8] sm:$0xff] %vm362, %v909
          %914 = vst.msk [vmem:[%s316 + $0x10] sm:$0xff] %vm362, %v910
          %915 = vst.msk [vmem:[%s316 + $0x18] sm:$0xff] %vm362, %v911
        $region52: #{tpu_custom_call.1} parent=31 // pred_fallthru
          _
        %s916 = sand.u32 %s151, 1
        %s917 = scalar_lea.sflag [#allocation8], %s916
        %s918 = sand.u32 %s151, 1
        %s919 = smul.addr %s918, 32
        %s920 = scalar_lea.vmem [#allocation12], %s919
        // Predicated region
        $region53: #{tpu_custom_call.1} parent=31 // pred_check
          %p921 = pneg %p161
        $region54: #{tpu_custom_call.1} parent=31 // pred_check_branch
          %923 = sbr.rel (%p921) target = $region56
        $region55: #{tpu_custom_call.1} parent=31 // pred_region
          %s924 = smul.u32 4, %s30
          %s926 = ssub.s32 512, 512
          %927 = vsyncadd %s917, %s926
          %s928 = sadd.s32 %s31, %s924
          %s929 = smul.addr %s29, 4
          %s930 = sadd.s32 %s928, %s929
          %s931 = smul.addr %s930, 128
          %s932 = scalar_lea.hbm %s3, %s931
          %s933 = sshll.u32 %s920, 4
          %s934 = int_to_ptr.vmem [resolvable:$true] %s933
          %939 = dma.vmem_to_hbm [thread:$0]  %s934, 512, %s932, %s917, 128, 128, 8
        $region56: #{tpu_custom_call.1} parent=31 // pred_fallthru
          _
      $region32: #{tpu_custom_call.1} parent=5 // pred_fallthru
        _
      %p940 = scmp.le.s32.totalorder 2, %s18
      // Predicated region
      $region57: #{tpu_custom_call.1} parent=5 // pred_check
        %p941 = pneg %p940
      $region58: #{tpu_custom_call.1} parent=5 // pred_check_branch
        %943 = sbr.rel (%p941) target = $region60
      $region59: #{tpu_custom_call.1} parent=5 // pred_region
        %s944 = ssub.s32 %s18, 2
        // Predicated region
        $region61: #{tpu_custom_call.1} parent=59 // pred_check
          %p945 = pneg %p167
        $region62: #{tpu_custom_call.1} parent=59 // pred_check_branch
          %947 = sbr.rel (%p945) target = $region64
        $region63: #{tpu_custom_call.1} parent=59 // pred_region
          %s948 = sand.u32 %s152, 1
          %s949 = scalar_lea.sflag [#allocation8], %s948
          %s950 = sand.u32 %s152, 1
          %s951 = smul.addr %s950, 32
          %s952 = scalar_lea.vmem [#allocation12], %s951
          %953 = dma.done %s949, 512
        $region64: #{tpu_custom_call.1} parent=59 // pred_fallthru
          _
      $region60: #{tpu_custom_call.1} parent=5 // pred_fallthru
        _
    $region6: #{tpu_custom_call.1} parent=1 // loop_footer
      %s22 = sadd.s32 1, %s18
    $region7: #{tpu_custom_call.1} parent=1 // loop_footer_branch
      %17 = sbr.rel target = $region3
    $region8: #{tpu_custom_call.1} parent=1 // loop_exit
      _
    %954 = vsyncpa [#allocation7], 1
    %s955 = scalar_lea.sflag [#allocation7], 1
    %956 = vsyncpa %s955, 1
    %957 = vsyncpa [#allocation10], 1
    %s958 = scalar_lea.sflag [#allocation10], 1
    %959 = vsyncpa %s958, 1
    %960 = vsyncpa [#allocation8], 1
    %s961 = scalar_lea.sflag [#allocation8], 1
    %962 = vsyncpa %s961, 1

</llo_original>
